<compile_context>
chip_gen: v6e
topology: v6e:2x2x1
jax: 0.10.0
libtpu: 0.0.40
codegen_flags: <defaults>
</compile_context>

<pallas_src>
import functools

import numpy as np
import jax
import jax.numpy as jnp
from jax import lax
from jax.experimental import pallas as pl
from jax.experimental.pallas import tpu as pltpu

EPS = 1e-5


def resblock_kernel(W, Cmid, Cout,
                    x_ref,      # (1, Cin, H*W)             f32
                    w1sc_ref,   # (Cmid+Cout, Cin)           bf16  (scale-folded)
                    w2_ref,     # (Cmid, 9*Cmid)             bf16  (scale-folded)
                    w3_ref,     # (Cout, Cmid)               bf16  (scale-folded)
                    b_ref,      # (Cmid+Cout+Cmid+Cout, 1)   f32   packed biases
                    mask_ref,   # (9, 1, H*W)                f32   3x3 tap validity
                    o_ref):     # (1, Cout, H*W)             f32
    HW = x_ref.shape[-1]

    x = x_ref[0].astype(jnp.bfloat16)                        # (Cin, HW)

    # ---- fused conv1 (1x1) + shortcut conv (1x1); BN scales already folded ----
    y = jnp.dot(w1sc_ref[...], x,
                preferred_element_type=jnp.float32)           # (Cmid+Cout, HW)
    y = y + b_ref[0:Cmid + Cout]                              # [b1 ; bsc]
    h = jnp.maximum(y[0:Cmid], 0.0)                           # conv1 branch + ReLU
    resid = y[Cmid:Cmid + Cout]                               # shortcut branch

    # ---- conv2 (3x3, pad=1): im2col via lane rolls * precomputed boundary mask ----
    taps = []
    t = 0
    for dy in (-1, 0, 1):
        for dx in (-1, 0, 1):
            shift = (-(dy * W + dx)) % HW
            shifted = pltpu.roll(h, shift, 1) if shift else h
            if dy == 0 and dx == 0:
                taps.append(shifted)                          # center tap: mask == 1
            else:
                taps.append(shifted * mask_ref[t])            # zero out-of-image taps
            t += 1
    stacked = jnp.concatenate(taps, axis=0).astype(jnp.bfloat16)  # (9*Cmid, HW)
    h2 = jnp.dot(w2_ref[...], stacked,
                 preferred_element_type=jnp.float32)          # (Cmid, HW)
    h2 = jnp.maximum(h2 + b_ref[Cmid + Cout:Cmid + Cout + Cmid], 0.0)

    # ---- conv3 (1x1) + bn3 ----
    h3 = jnp.dot(w3_ref[...], h2.astype(jnp.bfloat16),
                 preferred_element_type=jnp.float32)          # (Cout, HW)
    h3 = h3 + b_ref[Cmid + Cout + Cmid:Cmid + Cout + Cmid + Cout]

    # ---- residual add + ReLU, lane-dense store ----
    o_ref[0] = jnp.maximum(h3 + resid, 0.0).astype(o_ref.dtype)


def _tap_mask(H, W):
    """(9, 1, H*W) f32 validity mask for the 3x3 taps with padding=1."""
    pos = np.arange(H * W)
    hh, ww = pos // W, pos % W
    rows = []
    for dy in (-1, 0, 1):
        for dx in (-1, 0, 1):
            valid = ((hh + dy >= 0) & (hh + dy < H) &
                     (ww + dx >= 0) & (ww + dx < W))
            rows.append(valid.astype(np.float32))
    return jnp.asarray(np.stack(rows)[:, None, :])


def residual_block_pallas(x_nchw, p):
    """x_nchw: (N, Cin, H, W) float32 (PyTorch NCHW layout)."""
    N, Cin, H, W = x_nchw.shape
    Cmid = p["w2mat"].shape[0]
    Cout = p["w3t"].shape[0]
    HW = H * W

    x_cm = x_nchw.reshape(N, Cin, HW)        # free wrapper-side reshape
    mask = _tap_mask(H, W)                   # static, depends only on (H, W)

    kernel = functools.partial(resblock_kernel, W, Cmid, Cout)
    full = lambda a: pl.BlockSpec(a.shape, lambda n: (0,) * a.ndim)

    grid_spec = pltpu.PrefetchScalarGridSpec(
        num_scalar_prefetch=0,
        grid=(N,),
        in_specs=[
            pl.BlockSpec((1, Cin, HW), lambda n: (n, 0, 0)),
            full(p["w1sc"]), full(p["w2mat"]), full(p["w3t"]), full(p["bias"]),
            full(mask),
        ],
        out_specs=pl.BlockSpec((1, Cout, HW), lambda n: (n, 0, 0)),
    )

    out = pl.pallas_call(
        kernel,
        out_shape=jax.ShapeDtypeStruct((N, Cout, HW), x_nchw.dtype),
        grid_spec=grid_spec,
        compiler_params=pltpu.CompilerParams(
            dimension_semantics=("parallel",)),
    )(x_cm, p["w1sc"], p["w2mat"], p["w3t"], p["bias"], mask)

    return out.reshape(N, Cout, H, W)


# ----------------------------- parameter prep -----------------------------

def fold_bn(gamma, beta, mean, var, conv_bias):
    """Fold conv bias + eval-mode BatchNorm into per-channel scale / bias."""
    scale = gamma / jnp.sqrt(var + EPS)
    bias = beta + scale * (conv_bias - mean)
    return scale, bias


def make_raw_params(key, cin, cmid, cout):
    ks = jax.random.split(key, 8)
    raw = {}
    raw["w1"] = 0.1 * jax.random.normal(ks[0], (cin, cmid), jnp.float32)
    raw["w2"] = 0.1 * jax.random.normal(ks[1], (3, 3, cmid, cmid), jnp.float32)  # HWIO
    raw["w3"] = 0.1 * jax.random.normal(ks[2], (cmid, cout), jnp.float32)
    raw["wsc"] = 0.1 * jax.random.normal(ks[3], (cin, cout), jnp.float32)
    raw["cb1"] = 0.01 * jax.random.normal(ks[4], (cmid,), jnp.float32)
    raw["cb2"] = 0.01 * jax.random.normal(ks[5], (cmid,), jnp.float32)
    raw["cb3"] = 0.01 * jax.random.normal(ks[6], (cout,), jnp.float32)
    raw["cbsc"] = 0.01 * jax.random.normal(ks[7], (cout,), jnp.float32)

    def bn(c):
        gamma = 1.0 + 0.05 * jnp.arange(c, dtype=jnp.float32)
        beta = 0.01 * jnp.arange(c, dtype=jnp.float32) - 0.1
        mean = 0.02 * jnp.arange(c, dtype=jnp.float32)
        var = 1.0 + 0.1 * jnp.arange(c, dtype=jnp.float32)
        return gamma, beta, mean, var

    raw["bn1"] = bn(cmid)
    raw["bn2"] = bn(cmid)
    raw["bn3"] = bn(cout)
    raw["bnsc"] = bn(cout)
    return raw


def fold_params(raw):
    """Fold BN into weights/biases; f32 'math layout' params (channel-major)."""
    s1, b1 = fold_bn(*raw["bn1"], raw["cb1"])
    s2, b2 = fold_bn(*raw["bn2"], raw["cb2"])
    s3, b3 = fold_bn(*raw["bn3"], raw["cb3"])
    ssc, bsc = fold_bn(*raw["bnsc"], raw["cbsc"])
    f = {}
    f["w1t"] = s1[:, None] * raw["w1"].T                      # (Cmid, Cin)
    f["wsct"] = ssc[:, None] * raw["wsc"].T                   # (Cout, Cin)
    f["w2_scaled"] = raw["w2"] * s2[None, None, None, :]      # HWIO, scale on O
    f["w3t"] = s3[:, None] * raw["w3"].T                      # (Cout, Cmid)
    f["b1"], f["b2"], f["b3"], f["bsc"] = b1, b2, b3, bsc
    return f


def prepare_kernel_params(f):
    """Pack folded params into the kernel's fused / bf16 layouts."""
    w1sc = jnp.concatenate([f["w1t"], f["wsct"]], axis=0).astype(jnp.bfloat16)
    taps = [f["w2_scaled"][ky, kx].T for ky in range(3) for kx in range(3)]
    w2mat = jnp.concatenate(taps, axis=1).astype(jnp.bfloat16)   # (Cmid, 9*Cmid)
    w3t = f["w3t"].astype(jnp.bfloat16)                          # (Cout, Cmid)
    bias = jnp.concatenate(
        [f["b1"], f["bsc"], f["b2"], f["b3"]]).reshape(-1, 1).astype(jnp.float32)
    return dict(w1sc=w1sc, w2mat=w2mat, w3t=w3t, bias=bias)


# ------------------------------- reference --------------------------------

def residual_block_ref(x_nchw, f):
    """Pure-JAX NCHW reference with the same folded-BN math and the same
    bf16-operand / f32-accumulate numerics as the kernel."""
    xb = x_nchw.astype(jnp.bfloat16)
    h = jnp.einsum("oc,nchw->nohw", f["w1t"].astype(jnp.bfloat16), xb,
                   preferred_element_type=jnp.float32)
    h = jnp.maximum(h + f["b1"][None, :, None, None], 0.0)

    w2_oihw = jnp.transpose(f["w2_scaled"], (3, 2, 0, 1))
    h = lax.conv_general_dilated(
        h.astype(jnp.bfloat16), w2_oihw.astype(jnp.bfloat16),
        window_strides=(1, 1), padding="SAME",
        dimension_numbers=("NCHW", "OIHW", "NCHW"),
        preferred_element_type=jnp.float32)
    h = jnp.maximum(h + f["b2"][None, :, None, None], 0.0)

    h = jnp.einsum("oc,nchw->nohw", f["w3t"].astype(jnp.bfloat16),
                   h.astype(jnp.bfloat16),
                   preferred_element_type=jnp.float32)
    h = h + f["b3"][None, :, None, None]

    r = jnp.einsum("oc,nchw->nohw", f["wsct"].astype(jnp.bfloat16), xb,
                   preferred_element_type=jnp.float32)
    r = r + f["bsc"][None, :, None, None]
    return jnp.maximum(h + r, 0.0)


if __name__ == "__main__":
    N, H, W = 2, 16, 16
    CIN, CMID, COUT = 16, 8, 32      # in_channels, intermediate, out_channels

    key = jax.random.PRNGKey(0)
    kx_, kp = jax.random.split(key)
    x = jax.random.normal(kx_, (N, CIN, H, W), jnp.float32)   # NCHW (PyTorch)

    raw = make_raw_params(kp, CIN, CMID, COUT)
    folded = fold_params(raw)
    kparams = prepare_kernel_params(folded)

    out = jax.block_until_ready(residual_block_pallas(x, kparams))
    ref = jax.block_until_ready(residual_block_ref(x, folded))

    assert out.shape == (N, COUT, H, W)
    np.testing.assert_allclose(np.asarray(out), np.asarray(ref),
                               rtol=2e-3, atol=2e-3)
    print("KERNEL_OK")
</pallas_src>

<mosaic_0001>
module attributes {stable_mosaic.version = 11 : i64} {
  func.func @resblock_kernel(%arg0: i32, %arg1: memref<1x16x256xf32, #tpu.memory_space<vmem>>, %arg2: memref<40x16xbf16, #tpu.memory_space<vmem>>, %arg3: memref<8x72xbf16, #tpu.memory_space<vmem>>, %arg4: memref<32x8xbf16, #tpu.memory_space<vmem>>, %arg5: memref<80x1xf32, #tpu.memory_space<vmem>>, %arg6: memref<9x1x256xf32, #tpu.memory_space<vmem>>, %arg7: memref<1x32x256xf32, #tpu.memory_space<vmem>>) attributes {dimension_semantics = [#tpu.dimension_semantics<parallel>], iteration_bounds = array<i64: 2>, scalar_prefetch = 0 : i64, scratch_operands = 0 : i64, tpu.core_type = #tpu.core_type<tc>, window_params = [{transform_indices = @transform_0, window_bounds = array<i64: 1, 16, 256>}, {pipeline_mode = #tpu.pipeline_mode<synchronous>, transform_indices = @transform_1, window_bounds = array<i64: 40, 16>}, {pipeline_mode = #tpu.pipeline_mode<synchronous>, transform_indices = @transform_2, window_bounds = array<i64: 8, 72>}, {pipeline_mode = #tpu.pipeline_mode<synchronous>, transform_indices = @transform_3, window_bounds = array<i64: 32, 8>}, {pipeline_mode = #tpu.pipeline_mode<synchronous>, transform_indices = @transform_4, window_bounds = array<i64: 80, 1>}, {pipeline_mode = #tpu.pipeline_mode<synchronous>, transform_indices = @transform_5, window_bounds = array<i64: 9, 1, 256>}, {transform_indices = @transform_6, window_bounds = array<i64: 1, 32, 256>}]} {
    %c0 = arith.constant 0 : index
    %c0_0 = arith.constant 0 : index
    %c0_1 = arith.constant 0 : index
    %0 = vector.load %arg1[%c0, %c0_0, %c0_1] : memref<1x16x256xf32, #tpu.memory_space<vmem>>, vector<1x16x256xf32>
    %1 = vector.shape_cast %0 : vector<1x16x256xf32> to vector<16x256xf32>
    %2 = arith.truncf %1 : vector<16x256xf32> to vector<16x256xbf16>
    %c0_2 = arith.constant 0 : index
    %c0_3 = arith.constant 0 : index
    %3 = vector.load %arg2[%c0_2, %c0_3] : memref<40x16xbf16, #tpu.memory_space<vmem>>, vector<40x16xbf16>
    %cst = arith.constant dense<0.000000e+00> : vector<40x256xf32>
    %4 = tpu.matmul %3, %2, %cst {dimension_numbers = #tpu.dot_dimension_numbers<[1], [0], [0], [1], [0, 0, 1, 1], [], []>} : vector<40x16xbf16>, vector<16x256xbf16>, vector<40x256xf32> -> vector<40x256xf32>
    %c0_4 = arith.constant 0 : index
    %c0_5 = arith.constant 0 : index
    %5 = vector.load %arg5[%c0_4, %c0_5] : memref<80x1xf32, #tpu.memory_space<vmem>>, vector<40x1xf32>
    %6 = vector.broadcast %5 : vector<40x1xf32> to vector<40x256xf32>
    %7 = arith.addf %4, %6 : vector<40x256xf32>
    %8 = vector.extract_strided_slice %7 {offsets = [0, 0], sizes = [8, 256], strides = [1, 1]} : vector<40x256xf32> to vector<8x256xf32>
    %cst_6 = arith.constant 0.000000e+00 : f32
    %9 = vector.broadcast %cst_6 : f32 to vector<8x256xf32>
    %10 = arith.maximumf %8, %9 : vector<8x256xf32>
    %11 = vector.extract_strided_slice %7 {offsets = [8, 0], sizes = [32, 256], strides = [1, 1]} : vector<40x256xf32> to vector<32x256xf32>
    %c17_i32 = arith.constant 17 : i32
    %12 = tpu.dynamic_rotate %10 by %c17_i32 dim 1 : vector<8x256xf32>, i32 -> vector<8x256xf32>
    %c0_7 = arith.constant 0 : index
    %c0_8 = arith.constant 0 : index
    %c0_9 = arith.constant 0 : index
    %13 = vector.load %arg6[%c0_7, %c0_8, %c0_9] : memref<9x1x256xf32, #tpu.memory_space<vmem>>, vector<1x1x256xf32>
    %14 = vector.shape_cast %13 : vector<1x1x256xf32> to vector<1x256xf32>
    %15 = vector.broadcast %14 : vector<1x256xf32> to vector<8x256xf32>
    %16 = arith.mulf %12, %15 : vector<8x256xf32>
    %c16_i32 = arith.constant 16 : i32
    %17 = tpu.dynamic_rotate %10 by %c16_i32 dim 1 : vector<8x256xf32>, i32 -> vector<8x256xf32>
    %c1 = arith.constant 1 : index
    %c0_10 = arith.constant 0 : index
    %c0_11 = arith.constant 0 : index
    %18 = vector.load %arg6[%c1, %c0_10, %c0_11] : memref<9x1x256xf32, #tpu.memory_space<vmem>>, vector<1x1x256xf32>
    %19 = vector.shape_cast %18 : vector<1x1x256xf32> to vector<1x256xf32>
    %20 = vector.broadcast %19 : vector<1x256xf32> to vector<8x256xf32>
    %21 = arith.mulf %17, %20 : vector<8x256xf32>
    %c15_i32 = arith.constant 15 : i32
    %22 = tpu.dynamic_rotate %10 by %c15_i32 dim 1 : vector<8x256xf32>, i32 -> vector<8x256xf32>
    %c2 = arith.constant 2 : index
    %c0_12 = arith.constant 0 : index
    %c0_13 = arith.constant 0 : index
    %23 = vector.load %arg6[%c2, %c0_12, %c0_13] : memref<9x1x256xf32, #tpu.memory_space<vmem>>, vector<1x1x256xf32>
    %24 = vector.shape_cast %23 : vector<1x1x256xf32> to vector<1x256xf32>
    %25 = vector.broadcast %24 : vector<1x256xf32> to vector<8x256xf32>
    %26 = arith.mulf %22, %25 : vector<8x256xf32>
    %c1_i32 = arith.constant 1 : i32
    %27 = tpu.dynamic_rotate %10 by %c1_i32 dim 1 : vector<8x256xf32>, i32 -> vector<8x256xf32>
    %c3 = arith.constant 3 : index
    %c0_14 = arith.constant 0 : index
    %c0_15 = arith.constant 0 : index
    %28 = vector.load %arg6[%c3, %c0_14, %c0_15] : memref<9x1x256xf32, #tpu.memory_space<vmem>>, vector<1x1x256xf32>
    %29 = vector.shape_cast %28 : vector<1x1x256xf32> to vector<1x256xf32>
    %30 = vector.broadcast %29 : vector<1x256xf32> to vector<8x256xf32>
    %31 = arith.mulf %27, %30 : vector<8x256xf32>
    %c255_i32 = arith.constant 255 : i32
    %32 = tpu.dynamic_rotate %10 by %c255_i32 dim 1 : vector<8x256xf32>, i32 -> vector<8x256xf32>
    %c5 = arith.constant 5 : index
    %c0_16 = arith.constant 0 : index
    %c0_17 = arith.constant 0 : index
    %33 = vector.load %arg6[%c5, %c0_16, %c0_17] : memref<9x1x256xf32, #tpu.memory_space<vmem>>, vector<1x1x256xf32>
    %34 = vector.shape_cast %33 : vector<1x1x256xf32> to vector<1x256xf32>
    %35 = vector.broadcast %34 : vector<1x256xf32> to vector<8x256xf32>
    %36 = arith.mulf %32, %35 : vector<8x256xf32>
    %c241_i32 = arith.constant 241 : i32
    %37 = tpu.dynamic_rotate %10 by %c241_i32 dim 1 : vector<8x256xf32>, i32 -> vector<8x256xf32>
    %c6 = arith.constant 6 : index
    %c0_18 = arith.constant 0 : index
    %c0_19 = arith.constant 0 : index
    %38 = vector.load %arg6[%c6, %c0_18, %c0_19] : memref<9x1x256xf32, #tpu.memory_space<vmem>>, vector<1x1x256xf32>
    %39 = vector.shape_cast %38 : vector<1x1x256xf32> to vector<1x256xf32>
    %40 = vector.broadcast %39 : vector<1x256xf32> to vector<8x256xf32>
    %41 = arith.mulf %37, %40 : vector<8x256xf32>
    %c240_i32 = arith.constant 240 : i32
    %42 = tpu.dynamic_rotate %10 by %c240_i32 dim 1 : vector<8x256xf32>, i32 -> vector<8x256xf32>
    %c7 = arith.constant 7 : index
    %c0_20 = arith.constant 0 : index
    %c0_21 = arith.constant 0 : index
    %43 = vector.load %arg6[%c7, %c0_20, %c0_21] : memref<9x1x256xf32, #tpu.memory_space<vmem>>, vector<1x1x256xf32>
    %44 = vector.shape_cast %43 : vector<1x1x256xf32> to vector<1x256xf32>
    %45 = vector.broadcast %44 : vector<1x256xf32> to vector<8x256xf32>
    %46 = arith.mulf %42, %45 : vector<8x256xf32>
    %c239_i32 = arith.constant 239 : i32
    %47 = tpu.dynamic_rotate %10 by %c239_i32 dim 1 : vector<8x256xf32>, i32 -> vector<8x256xf32>
    %c8 = arith.constant 8 : index
    %c0_22 = arith.constant 0 : index
    %c0_23 = arith.constant 0 : index
    %48 = vector.load %arg6[%c8, %c0_22, %c0_23] : memref<9x1x256xf32, #tpu.memory_space<vmem>>, vector<1x1x256xf32>
    %49 = vector.shape_cast %48 : vector<1x1x256xf32> to vector<1x256xf32>
    %50 = vector.broadcast %49 : vector<1x256xf32> to vector<8x256xf32>
    %51 = arith.mulf %47, %50 : vector<8x256xf32>
    %52 = tpu.concatenate %16, %21, %26, %31, %10, %36, %41, %46, %51 in 0 : vector<8x256xf32>, vector<8x256xf32>, vector<8x256xf32>, vector<8x256xf32>, vector<8x256xf32>, vector<8x256xf32>, vector<8x256xf32>, vector<8x256xf32>, vector<8x256xf32> -> vector<72x256xf32>
    %53 = arith.truncf %52 : vector<72x256xf32> to vector<72x256xbf16>
    %c0_24 = arith.constant 0 : index
    %c0_25 = arith.constant 0 : index
    %54 = vector.load %arg3[%c0_24, %c0_25] : memref<8x72xbf16, #tpu.memory_space<vmem>>, vector<8x72xbf16>
    %cst_26 = arith.constant dense<0.000000e+00> : vector<8x256xf32>
    %55 = tpu.matmul %54, %53, %cst_26 {dimension_numbers = #tpu.dot_dimension_numbers<[1], [0], [0], [1], [0, 0, 1, 1], [], []>} : vector<8x72xbf16>, vector<72x256xbf16>, vector<8x256xf32> -> vector<8x256xf32>
    %c40 = arith.constant 40 : index
    %c0_27 = arith.constant 0 : index
    %56 = vector.load %arg5[%c40, %c0_27] : memref<80x1xf32, #tpu.memory_space<vmem>>, vector<8x1xf32>
    %57 = vector.broadcast %56 : vector<8x1xf32> to vector<8x256xf32>
    %58 = arith.addf %55, %57 : vector<8x256xf32>
    %cst_28 = arith.constant 0.000000e+00 : f32
    %59 = vector.broadcast %cst_28 : f32 to vector<8x256xf32>
    %60 = arith.maximumf %58, %59 : vector<8x256xf32>
    %c0_29 = arith.constant 0 : index
    %c0_30 = arith.constant 0 : index
    %61 = vector.load %arg4[%c0_29, %c0_30] : memref<32x8xbf16, #tpu.memory_space<vmem>>, vector<32x8xbf16>
    %62 = arith.truncf %60 : vector<8x256xf32> to vector<8x256xbf16>
    %cst_31 = arith.constant dense<0.000000e+00> : vector<32x256xf32>
    %63 = tpu.matmul %61, %62, %cst_31 {dimension_numbers = #tpu.dot_dimension_numbers<[1], [0], [0], [1], [0, 0, 1, 1], [], []>} : vector<32x8xbf16>, vector<8x256xbf16>, vector<32x256xf32> -> vector<32x256xf32>
    %c48 = arith.constant 48 : index
    %c0_32 = arith.constant 0 : index
    %64 = vector.load %arg5[%c48, %c0_32] : memref<80x1xf32, #tpu.memory_space<vmem>>, vector<32x1xf32>
    %65 = vector.broadcast %64 : vector<32x1xf32> to vector<32x256xf32>
    %66 = arith.addf %63, %65 : vector<32x256xf32>
    %67 = arith.addf %66, %11 : vector<32x256xf32>
    %cst_33 = arith.constant 0.000000e+00 : f32
    %68 = vector.broadcast %cst_33 : f32 to vector<32x256xf32>
    %69 = arith.maximumf %67, %68 : vector<32x256xf32>
    %c0_34 = arith.constant 0 : index
    %c0_35 = arith.constant 0 : index
    %c0_36 = arith.constant 0 : index
    %70 = vector.load %arg7[%c0_34, %c0_35, %c0_36] : memref<1x32x256xf32, #tpu.memory_space<vmem>>, vector<1x32x256xf32>
    %71 = vector.shape_cast %70 : vector<1x32x256xf32> to vector<32x256xf32>
    %72 = vector.shape_cast %69 : vector<32x256xf32> to vector<1x32x256xf32>
    tpu.vector_store %arg7[%c0_34, %c0_35, %c0_36], %72 {strides = array<i32>} : memref<1x32x256xf32, #tpu.memory_space<vmem>>, vector<1x32x256xf32>,
    return
  }
  func.func @transform_0(%arg0: i32) -> (i32, i32, i32) {
    %c0_i32 = arith.constant 0 : i32
    %c0_i32_0 = arith.constant 0 : i32
    %c0_i32_1 = arith.constant 0 : i32
    return %arg0, %c0_i32, %c0_i32_0 : i32, i32, i32
  }
  func.func @transform_1(%arg0: i32) -> (i32, i32) {
    %c0_i32 = arith.constant 0 : i32
    %c0_i32_0 = arith.constant 0 : i32
    %c0_i32_1 = arith.constant 0 : i32
    return %c0_i32, %c0_i32_0 : i32, i32
  }
  func.func @transform_2(%arg0: i32) -> (i32, i32) {
    %c0_i32 = arith.constant 0 : i32
    %c0_i32_0 = arith.constant 0 : i32
    %c0_i32_1 = arith.constant 0 : i32
    return %c0_i32, %c0_i32_0 : i32, i32
  }
  func.func @transform_3(%arg0: i32) -> (i32, i32) {
    %c0_i32 = arith.constant 0 : i32
    %c0_i32_0 = arith.constant 0 : i32
    %c0_i32_1 = arith.constant 0 : i32
    return %c0_i32, %c0_i32_0 : i32, i32
  }
  func.func @transform_4(%arg0: i32) -> (i32, i32) {
    %c0_i32 = arith.constant 0 : i32
    %c0_i32_0 = arith.constant 0 : i32
    %c0_i32_1 = arith.constant 0 : i32
    return %c0_i32, %c0_i32_0 : i32, i32
  }
  func.func @transform_5(%arg0: i32) -> (i32, i32, i32) {
    %c0_i32 = arith.constant 0 : i32
    %c0_i32_0 = arith.constant 0 : i32
    %c0_i32_1 = arith.constant 0 : i32
    %c0_i32_2 = arith.constant 0 : i32
    return %c0_i32, %c0_i32_0, %c0_i32_1 : i32, i32, i32
  }
  func.func @transform_6(%arg0: i32) -> (i32, i32, i32) {
    %c0_i32 = arith.constant 0 : i32
    %c0_i32_0 = arith.constant 0 : i32
    %c0_i32_1 = arith.constant 0 : i32
    return %arg0, %c0_i32, %c0_i32_0 : i32, i32, i32
  }
}

</mosaic_0001>

<llo_original>
// kernel: tpu_custom_call.1
$region0: #{tpu_custom_call.1}
  #allocation0 [shape = 'u32[]', space=smem, size = 0x4, offset = 0x4, fixed_abs, tag = 'smem constant byte address 0x4 - core index']
  #allocation1 [shape = 'u32[144,128]{1,0:T(1,128)}', space=vmem, size = 0x12000, scoped, tag = 'internal scratch']
  %s0 = inlined_call_operand.vmem [shape: f32[2,16,256], index: 0, kind: input, shape index: {}]
  %s1 = inlined_call_operand.vmem [shape: bf16[40,16], index: 1, kind: input, shape index: {}]
  %s2 = inlined_call_operand.vmem [shape: bf16[8,72], index: 2, kind: input, shape index: {}]
  %s3 = inlined_call_operand.vmem [shape: bf16[32,8], index: 3, kind: input, shape index: {}]
  %s4 = inlined_call_operand.vmem [shape: f32[80,1], index: 4, kind: input, shape index: {}]
  %s5 = inlined_call_operand.vmem [shape: f32[9,1,256], index: 5, kind: input, shape index: {}]
  %s6 = inlined_call_operand.hbm [shape: f32[2,32,256], index: 6, kind: output, shape index: {}]
  %s7 = sld [smem:[#allocation0]]
  $region57: #{tpu_custom_call.1} parent=0
    _
  %s9 = ssub.s32 1, %s7
  %s10 = scalar_select 0, %s9, %s7
  $region1: #{tpu_custom_call.1} parent=0
    #allocation2 [shape = 'u8[65536]{0}', space=vmem, size = 0x10000, scoped, tag = 'output window, operand 0']
    #allocation3 [shape = 's32[2]{0}', space=sflag, size = 0x8, scoped, tag = 'scoped memory for tpu_custom_call.1']
    %11 = vsyncpa [#allocation3], 0
    %s12 = scalar_lea.sflag [#allocation3], 1
    %13 = vsyncpa %s12, 0
    loop: start=0, step=1, limit=4
    $region2: #{tpu_custom_call.1} parent=1 // loop_pre_header
      _
    $region3: #{tpu_custom_call.1} parent=1 // loop_header
      %s15 = sphi 0, %s19
      %p16 = scmp.ge.s32.totalorder %s15, 4
      %s25 = sphi 0, %s27
      %s28 = sphi 0, %s25
      %s29 = sphi 0, %s28
      %s45 = sphi 0, %s29
      %s49 = sphi 0, %s49
      %s51 = sphi 0, %s49
      %s52 = sphi 0, %s51
      %s66 = sphi 0, %s52
      %s70 = sphi 0, %s70
      %s72 = sphi 0, %s70
      %s73 = sphi 0, %s72
      %s87 = sphi 0, %s73
      %s91 = sphi 0, %s91
      %s93 = sphi 0, %s91
      %s94 = sphi 0, %s93
      %s108 = sphi 0, %s94
      %s112 = sphi 0, %s112
      %s114 = sphi 0, %s112
      %s115 = sphi 0, %s114
      %s129 = sphi 0, %s115
      %s133 = sphi 0, %s133
      %s135 = sphi 0, %s133
      %s136 = sphi 0, %s135
      %s150 = sphi 0, %s136
      %s156 = sphi 0, %s158
      %s159 = sphi 0, %s156
      %s160 = sphi 0, %s159
      %s176 = sphi 0, %s160
    $region4: #{tpu_custom_call.1} parent=1 // loop_header_branch
      %18 = sbr.rel (%p16) target = $region8
    $region5: #{tpu_custom_call.1} parent=1 // loop_body
      %s20 = ssub.s32 %s15, 1
      %s21 = ssub.s32 %s15, 2
      %s22 = sadd.s32 %s15, 1
      %s23 = ssub.s32 %s15, %s22
      %p24 = scmp.eq.s32.totalorder %s23, 0
      %s26 = sadd.s32 %s25, 1
      %s27 = scalar_select %p24, %s25, %s26
      %p30 = pneg %p24
      %p31 = scmp.eq.s32.totalorder %s15, 1
      %p32 = por %p30, %p31
      %p33 = scmp.ne.s32.totalorder %s25, %s28
      %p34 = scmp.eq.s32.totalorder %s15, 0
      %p35 = por %p33, %p34
      %p36 = scmp.ne.s32.totalorder %s25, %s28
      %p37 = scmp.eq.s32.totalorder %s20, 1
      %p38 = por %p36, %p37
      %p39 = scmp.ne.s32.totalorder %s28, %s29
      %p40 = scmp.eq.s32.totalorder %s20, 0
      %p41 = por %p39, %p40
      %p42 = scmp.ne.s32.totalorder %s28, %s29
      %p43 = scmp.eq.s32.totalorder %s21, 1
      %p44 = por %p42, %p43
      %p46 = scmp.ne.s32.totalorder %s29, %s45
      %p47 = scmp.eq.s32.totalorder %s21, 0
      %p48 = por %p46, %p47
      %s50 = sadd.s32 %s49, 1
      %p53 = scmp.eq.s32.totalorder %s15, 1
      %p54 = scmp.ne.s32.totalorder %s49, %s51
      %p55 = scmp.eq.s32.totalorder %s15, 0
      %p56 = por %p54, %p55
      %p57 = scmp.ne.s32.totalorder %s49, %s51
      %p58 = scmp.eq.s32.totalorder %s20, 1
      %p59 = por %p57, %p58
      %p60 = scmp.ne.s32.totalorder %s51, %s52
      %p61 = scmp.eq.s32.totalorder %s20, 0
      %p62 = por %p60, %p61
      %p63 = scmp.ne.s32.totalorder %s51, %s52
      %p64 = scmp.eq.s32.totalorder %s21, 1
      %p65 = por %p63, %p64
      %p67 = scmp.ne.s32.totalorder %s52, %s66
      %p68 = scmp.eq.s32.totalorder %s21, 0
      %p69 = por %p67, %p68
      %s71 = sadd.s32 %s70, 1
      %p74 = scmp.eq.s32.totalorder %s15, 1
      %p75 = scmp.ne.s32.totalorder %s70, %s72
      %p76 = scmp.eq.s32.totalorder %s15, 0
      %p77 = por %p75, %p76
      %p78 = scmp.ne.s32.totalorder %s70, %s72
      %p79 = scmp.eq.s32.totalorder %s20, 1
      %p80 = por %p78, %p79
      %p81 = scmp.ne.s32.totalorder %s72, %s73
      %p82 = scmp.eq.s32.totalorder %s20, 0
      %p83 = por %p81, %p82
      %p84 = scmp.ne.s32.totalorder %s72, %s73
      %p85 = scmp.eq.s32.totalorder %s21, 1
      %p86 = por %p84, %p85
      %p88 = scmp.ne.s32.totalorder %s73, %s87
      %p89 = scmp.eq.s32.totalorder %s21, 0
      %p90 = por %p88, %p89
      %s92 = sadd.s32 %s91, 1
      %p95 = scmp.eq.s32.totalorder %s15, 1
      %p96 = scmp.ne.s32.totalorder %s91, %s93
      %p97 = scmp.eq.s32.totalorder %s15, 0
      %p98 = por %p96, %p97
      %p99 = scmp.ne.s32.totalorder %s91, %s93
      %p100 = scmp.eq.s32.totalorder %s20, 1
      %p101 = por %p99, %p100
      %p102 = scmp.ne.s32.totalorder %s93, %s94
      %p103 = scmp.eq.s32.totalorder %s20, 0
      %p104 = por %p102, %p103
      %p105 = scmp.ne.s32.totalorder %s93, %s94
      %p106 = scmp.eq.s32.totalorder %s21, 1
      %p107 = por %p105, %p106
      %p109 = scmp.ne.s32.totalorder %s94, %s108
      %p110 = scmp.eq.s32.totalorder %s21, 0
      %p111 = por %p109, %p110
      %s113 = sadd.s32 %s112, 1
      %p116 = scmp.eq.s32.totalorder %s15, 1
      %p117 = scmp.ne.s32.totalorder %s112, %s114
      %p118 = scmp.eq.s32.totalorder %s15, 0
      %p119 = por %p117, %p118
      %p120 = scmp.ne.s32.totalorder %s112, %s114
      %p121 = scmp.eq.s32.totalorder %s20, 1
      %p122 = por %p120, %p121
      %p123 = scmp.ne.s32.totalorder %s114, %s115
      %p124 = scmp.eq.s32.totalorder %s20, 0
      %p125 = por %p123, %p124
      %p126 = scmp.ne.s32.totalorder %s114, %s115
      %p127 = scmp.eq.s32.totalorder %s21, 1
      %p128 = por %p126, %p127
      %p130 = scmp.ne.s32.totalorder %s115, %s129
      %p131 = scmp.eq.s32.totalorder %s21, 0
      %p132 = por %p130, %p131
      %s134 = sadd.s32 %s133, 1
      %p137 = scmp.eq.s32.totalorder %s15, 1
      %p138 = scmp.ne.s32.totalorder %s133, %s135
      %p139 = scmp.eq.s32.totalorder %s15, 0
      %p140 = por %p138, %p139
      %p141 = scmp.ne.s32.totalorder %s133, %s135
      %p142 = scmp.eq.s32.totalorder %s20, 1
      %p143 = por %p141, %p142
      %p144 = scmp.ne.s32.totalorder %s135, %s136
      %p145 = scmp.eq.s32.totalorder %s20, 0
      %p146 = por %p144, %p145
      %p147 = scmp.ne.s32.totalorder %s135, %s136
      %p148 = scmp.eq.s32.totalorder %s21, 1
      %p149 = por %p147, %p148
      %p151 = scmp.ne.s32.totalorder %s136, %s150
      %p152 = scmp.eq.s32.totalorder %s21, 0
      %p153 = por %p151, %p152
      %s154 = ssub.s32 %s15, %s22
      %p155 = scmp.eq.s32.totalorder %s154, 0
      %s157 = sadd.s32 %s156, 1
      %s158 = scalar_select %p155, %s156, %s157
      %p161 = pneg %p155
      %p162 = scmp.eq.s32.totalorder %s15, 1
      %p163 = por %p161, %p162
      %p164 = scmp.ne.s32.totalorder %s156, %s159
      %p165 = scmp.eq.s32.totalorder %s15, 0
      %p166 = por %p164, %p165
      %p167 = scmp.ne.s32.totalorder %s156, %s159
      %p168 = scmp.eq.s32.totalorder %s20, 1
      %p169 = por %p167, %p168
      %p170 = scmp.ne.s32.totalorder %s159, %s160
      %p171 = scmp.eq.s32.totalorder %s20, 0
      %p172 = por %p170, %p171
      %p173 = scmp.ne.s32.totalorder %s159, %s160
      %p174 = scmp.eq.s32.totalorder %s21, 1
      %p175 = por %p173, %p174
      %p177 = scmp.ne.s32.totalorder %s160, %s176
      %p178 = scmp.eq.s32.totalorder %s21, 0
      %p179 = por %p177, %p178
      %p180 = scmp.le.s32.totalorder 1, %s15
      %p181 = scmp.lt.s32.totalorder %s15, 3
      %p182 = pnand %p180, %p181
      %p183 = pneg %p182
      // Predicated region
      $region9: #{tpu_custom_call.1} parent=5 // pred_check
        _
      $region10: #{tpu_custom_call.1} parent=5 // pred_check_branch
        %185 = sbr.rel (%p182) target = $region12
      $region11: #{tpu_custom_call.1} parent=5 // pred_region
        %s186 = ssub.s32 %s15, 1
        // Predicated region
        $region13: #{tpu_custom_call.1} parent=11 // pred_check
          %p187 = pneg %p62
        $region14: #{tpu_custom_call.1} parent=11 // pred_check_branch
          %189 = sbr.rel (%p187) target = $region16
        $region15: #{tpu_custom_call.1} parent=11 // pred_region
          _
        $region16: #{tpu_custom_call.1} parent=11 // pred_fallthru
          _
        // Predicated region
        $region17: #{tpu_custom_call.1} parent=11 // pred_check
          %p190 = pneg %p83
        $region18: #{tpu_custom_call.1} parent=11 // pred_check_branch
          %192 = sbr.rel (%p190) target = $region20
        $region19: #{tpu_custom_call.1} parent=11 // pred_region
          _
        $region20: #{tpu_custom_call.1} parent=11 // pred_fallthru
          _
        // Predicated region
        $region21: #{tpu_custom_call.1} parent=11 // pred_check
          %p193 = pneg %p104
        $region22: #{tpu_custom_call.1} parent=11 // pred_check_branch
          %195 = sbr.rel (%p193) target = $region24
        $region23: #{tpu_custom_call.1} parent=11 // pred_region
          _
        $region24: #{tpu_custom_call.1} parent=11 // pred_fallthru
          _
        // Predicated region
        $region25: #{tpu_custom_call.1} parent=11 // pred_check
          %p196 = pneg %p125
        $region26: #{tpu_custom_call.1} parent=11 // pred_check_branch
          %198 = sbr.rel (%p196) target = $region28
        $region27: #{tpu_custom_call.1} parent=11 // pred_region
          _
        $region28: #{tpu_custom_call.1} parent=11 // pred_fallthru
          _
        // Predicated region
        $region29: #{tpu_custom_call.1} parent=11 // pred_check
          %p199 = pneg %p146
        $region30: #{tpu_custom_call.1} parent=11 // pred_check_branch
          %201 = sbr.rel (%p199) target = $region32
        $region31: #{tpu_custom_call.1} parent=11 // pred_region
          _
        $region32: #{tpu_custom_call.1} parent=11 // pred_fallthru
          _
      $region12: #{tpu_custom_call.1} parent=5 // pred_fallthru
        _
      %p202 = scmp.lt.s32.totalorder %s15, 2
      // Predicated region
      $region33: #{tpu_custom_call.1} parent=5 // pred_check
        %p203 = pneg %p202
      $region34: #{tpu_custom_call.1} parent=5 // pred_check_branch
        %205 = sbr.rel (%p203) target = $region36
      $region35: #{tpu_custom_call.1} parent=5 // pred_region
        // Predicated region
        $region37: #{tpu_custom_call.1} parent=35 // pred_check
          %p206 = pneg %p35
        $region38: #{tpu_custom_call.1} parent=35 // pred_check_branch
          %208 = sbr.rel (%p206) target = $region40
        $region39: #{tpu_custom_call.1} parent=35 // pred_region
          %p209 = scmp.lt.s32.totalorder %s15, 1
          %s210 = scalar_select %p209, %s15, 1
          %s211 = smul.addr %s210, 4
          %s212 = smul.addr %s211, 8
          %s213 = scalar_lea.vmem %s0, %s212
        $region40: #{tpu_custom_call.1} parent=35 // pred_fallthru
          _
      $region36: #{tpu_custom_call.1} parent=5 // pred_fallthru
        _
      %p214 = scmp.le.s32.totalorder 1, %s15
      %p215 = scmp.lt.s32.totalorder %s15, 3
      %p216 = pnand %p214, %p215
      %p217 = pneg %p216
      // Predicated region
      $region41: #{tpu_custom_call.1} parent=5 // pred_check
        _
      $region42: #{tpu_custom_call.1} parent=5 // pred_check_branch
        %219 = sbr.rel (%p216) target = $region44
      $region43: #{tpu_custom_call.1} parent=5 // pred_region
        %s220 = ssub.s32 %s15, 1
        %p221 = scmp.lt.s32.totalorder %s20, 1
        %s222 = scalar_select %p221, %s20, 1
        %s223 = smul.addr %s222, 4
        %s224 = smul.addr %s223, 8
        %s225 = scalar_lea.vmem %s0, %s224
        %p226 = pneg %p41
        %p227 = pneg %p38
        %p228 = pneg %p62
        %p229 = pneg %p59
        %p230 = pneg %p83
        %p231 = pneg %p80
        %p232 = pneg %p104
        %p233 = pneg %p101
        %p234 = pneg %p125
        %p235 = pneg %p122
        %p236 = pneg %p146
        %p237 = pneg %p143
        %p238 = pneg %p172
        %p239 = pneg %p169
        %s240 = sand.u32 %s159, 1
        %s241 = scalar_lea.sflag [#allocation3], %s240
        %s242 = sand.u32 %s159, 1
        %s243 = smul.addr %s242, 64
        %s244 = scalar_lea.vmem [#allocation2], %s243
        %p245 = scmp.lt.s32.totalorder %s20, 1
        %s246 = scalar_select %p245, %s20, 1
        %s247 = smul.addr %s246, 4
        %s248 = smul.addr %s247, 8
        %s249 = scalar_lea.vmem %s0, %s248
        %v251 = vld [vmem:[%s249] sm:$0xff]
        %v252 = vld [vmem:[%s249 + $0x8] sm:$0xff]
        %v253 = vld [vmem:[%s249 + $0x10] sm:$0xff]
        %v254 = vld [vmem:[%s249 + $0x18] sm:$0xff]
        %v255 = vpack.c.bf16 %v253, %v251
        %v256 = vpack.c.bf16 %v254, %v252
        %v257 = vld [vmem:[%s1] sm:$0xf]
        %v258 = vld [vmem:[%s1 + $0x4] sm:$0xf]
        %v259 = vld [vmem:[%s1 + $0x8] sm:$0xf]
        %v260 = vld [vmem:[%s1 + $0xc] sm:$0xf]
        %v261 = vld [vmem:[%s1 + $0x10] sm:$0xf]
        %v262 = vld [vmem:[%s4] sm:$0xff]
        %v263 = vld [vmem:[%s4 + $0x8] sm:$0xff]
        %v264 = vld [vmem:[%s4 + $0x10] sm:$0xff]
        %v265 = vld [vmem:[%s4 + $0x18] sm:$0xff]
        %v266 = vld [vmem:[%s4 + $0x20] sm:$0xff]
        %268 = vset.pattern.permute.xlu0 0
        %269 = vperm.xlu0 %268, %v262
        %v270 = vpop.permute.xlu0 %269
        %273 = vset.pattern.permute.xlu0 0
        %274 = vperm.xlu0 %273, %v263
        %v275 = vpop.permute.xlu0 %274
        %278 = vset.pattern.permute.xlu0 0
        %279 = vperm.xlu0 %278, %v264
        %v280 = vpop.permute.xlu0 %279
        %283 = vset.pattern.permute.xlu0 0
        %284 = vperm.xlu0 %283, %v265
        %v285 = vpop.permute.xlu0 %284
        %288 = vset.pattern.permute.xlu0 0
        %289 = vperm.xlu0 %288, %v266
        %v290 = vpop.permute.xlu0 %289
        %v297 = vunpack.c.l.b16 %v257
        %v298 = vunpack.c.l.b16 %v258
        %v299 = vunpack.c.l.b16 %v259
        %v300 = vunpack.c.l.b16 %v260
        %v301 = vunpack.c.l.b16 %v261
        %v302 = vpack.c.b16 %v298, %v297
        %v303 = vpack.c.b16 %v300, %v299
        %v304 = vpack.c.b16 %v301, %v301
        %vm305 = vcmask 130048
        %v307 = vsel %vm305, %v302, 0
        %v310 = vsel %vm305, %v303, 0
        %v313 = vsel %vm305, %v304, 0
        %315 = vmatprep.subr.bf16.mxu0 0
        %316 = vmatpush1.bf16.msra.mxu0 0
        %317 = vmatprep.subr.bf16.mxu0 0
        %318 = vmatpush1.bf16.msra.mxu0 0
        %319 = vmatprep.subr.bf16.mxu0 0
        %320 = vmatpush1.bf16.msra.mxu0 0
        %321 = vmatprep.subr.bf16.mxu0 0
        %322 = vmatpush1.bf16.msra.mxu0 0
        %323 = vmatprep.subr.bf16.mxu0 0
        %324 = vmatpush1.bf16.msra.mxu0 0
        %325 = vmatprep.subr.bf16.mxu0 0
        %326 = vmatpush1.bf16.msra.mxu0 0
        %327 = vmatprep.subr.bf16.mxu0 0
        %328 = vmatpush1.bf16.msra.mxu0 0
        %329 = vmatprep.subr.bf16.mxu0 %v256
        %330 = vmatpush1.bf16.msra.mxu0 %v255
        %331 = vmatprep.subr.bf16.mxu0 0
        %332 = vmatpush2.bf16.msra.mxu0 0
        %333 = vmatprep.subr.bf16.mxu0 0
        %334 = vmatpush2.bf16.msra.mxu0 0
        %335 = vmatprep.subr.bf16.mxu0 0
        %336 = vmatpush2.bf16.msra.mxu0 0
        %337 = vmatprep.subr.bf16.mxu0 0
        %338 = vmatpush2.bf16.msra.mxu0 0
        %339 = vmatprep.subr.bf16.mxu0 0
        %340 = vmatpush2.bf16.msra.mxu0 0
        %341 = vmatprep.subr.bf16.mxu0 0
        %342 = vmatpush2.bf16.msra.mxu0 0
        %343 = vmatprep.subr.bf16.mxu0 0
        %344 = vmatpush2.bf16.msra.mxu0 0
        %345 = vmatprep.subr.bf16.mxu0 0
        %346 = vmatpush2.bf16.msra.mxu0 0
        %347 = vmatprep.mubr.bf16.mxu0 0
        %348 = vmatmul.mubr.bf16.gmra.mxu0 %v307
        %v349 = vpop.f32.mrf.mxu0
        %v350 = vadd.f32 %v270, %v349
        %v351 = vpop.f32.mrf.mxu0
        %v352 = vadd.f32 %v270, %v351
        %v353 = vpop.f32.mrf.mxu0
        %v354 = vadd.f32 %v275, %v353
        %v355 = vpop.f32.mrf.mxu0
        %v356 = vadd.f32 %v275, %v355
        %357 = vmatprep.mubr.bf16.mxu0 0
        %358 = vmatmul.mubr.bf16.gmra.mxu0 %v310
        %v359 = vpop.f32.mrf.mxu0
        %v360 = vadd.f32 %v280, %v359
        %v361 = vpop.f32.mrf.mxu0
        %v362 = vadd.f32 %v280, %v361
        %v363 = vpop.f32.mrf.mxu0
        %v364 = vadd.f32 %v285, %v363
        %v365 = vpop.f32.mrf.mxu0
        %v366 = vadd.f32 %v285, %v365
        %367 = vmatprep.mubr.bf16.mxu0 0
        %368 = vmatmul.mubr.bf16.gmra.mxu0 %v313
        %v369 = vpop.f32.mrf.mxu0
        %v370 = vadd.f32 %v290, %v369
        %v371 = vpop.f32.mrf.mxu0
        %v372 = vadd.f32 %v290, %v371
        %v373 = vpop.f32.mrf.mxu0
        %v374 = vpop.f32.mrf.mxu0
        %375 = vdwg.mxu0
        %v376 = vmax.f32 %v350, 0.0
        %v377 = vmax.f32 %v352, 0.0
        %378 = vrot.lane.b32.xlu0 %v376, 17
        %v379 = vpop.permute.xlu0 %378
        %380 = vrot.lane.b32.xlu0 %v377, 17
        %v381 = vpop.permute.xlu0 %380
        %v382 = vlaneseq
        %v383 = vand.u32 %v382, 127
        %vm384 = vcmp.lt.s32.totalorder %v383, 17
        %v385 = vsel %vm384, %v379, %v381
        %v386 = vsel %vm384, %v381, %v379
        %v387 = vld [vmem:[%s5] sm:$0x3]
        %v389 = vlaneseq
        %v390 = vshrl.u32 %v389, 7
        %v391 = vsub.s32 0, %v390
        %v392 = vrot.slane %v387, %v391
        %v393 = vlaneseq
        %v394 = vshrl.u32 %v393, 7
        %v395 = vsub.s32 1, %v394
        %v396 = vrot.slane %v387, %v395
        %v399 = vmul.f32 %v386, %v392
        %v400 = vmul.f32 %v385, %v396
        %401 = vrot.lane.b32.xlu0 %v376, 16
        %v402 = vpop.permute.xlu0 %401
        %403 = vrot.lane.b32.xlu0 %v377, 16
        %v404 = vpop.permute.xlu0 %403
        %vm405 = vcmp.lt.s32.totalorder %v383, 16
        %v406 = vsel %vm405, %v402, %v404
        %v407 = vsel %vm405, %v404, %v402
        %s408 = scalar_lea.vmem %s5, 2
        %v409 = vld [vmem:[%s408] sm:$0x3]
        %v411 = vlaneseq
        %v412 = vshrl.u32 %v411, 7
        %v413 = vsub.s32 0, %v412
        %v414 = vrot.slane %v409, %v413
        %v415 = vlaneseq
        %v416 = vshrl.u32 %v415, 7
        %v417 = vsub.s32 1, %v416
        %v418 = vrot.slane %v409, %v417
        %v421 = vmul.f32 %v407, %v414
        %v422 = vmul.f32 %v406, %v418
        %423 = vrot.lane.b32.xlu0 %v376, 15
        %v424 = vpop.permute.xlu0 %423
        %425 = vrot.lane.b32.xlu0 %v377, 15
        %v426 = vpop.permute.xlu0 %425
        %vm427 = vcmp.lt.s32.totalorder %v383, 15
        %v428 = vsel %vm427, %v424, %v426
        %v429 = vsel %vm427, %v426, %v424
        %s430 = scalar_lea.vmem %s5, 4
        %v431 = vld [vmem:[%s430] sm:$0x3]
        %v433 = vlaneseq
        %v434 = vshrl.u32 %v433, 7
        %v435 = vsub.s32 0, %v434
        %v436 = vrot.slane %v431, %v435
        %v437 = vlaneseq
        %v438 = vshrl.u32 %v437, 7
        %v439 = vsub.s32 1, %v438
        %v440 = vrot.slane %v431, %v439
        %v443 = vmul.f32 %v429, %v436
        %v444 = vmul.f32 %v428, %v440
        %445 = vrot.lane.b32.xlu0 %v376, 1
        %v446 = vpop.permute.xlu0 %445
        %447 = vrot.lane.b32.xlu0 %v377, 1
        %v448 = vpop.permute.xlu0 %447
        %vm449 = vcmp.lt.s32.totalorder %v383, 1
        %v450 = vsel %vm449, %v446, %v448
        %v451 = vsel %vm449, %v448, %v446
        %s452 = scalar_lea.vmem %s5, 6
        %v453 = vld [vmem:[%s452] sm:$0x3]
        %v455 = vlaneseq
        %v456 = vshrl.u32 %v455, 7
        %v457 = vsub.s32 0, %v456
        %v458 = vrot.slane %v453, %v457
        %v459 = vlaneseq
        %v460 = vshrl.u32 %v459, 7
        %v461 = vsub.s32 1, %v460
        %v462 = vrot.slane %v453, %v461
        %v465 = vmul.f32 %v451, %v458
        %v466 = vmul.f32 %v450, %v462
        %467 = vrot.lane.b32.xlu0 %v376, 127
        %v468 = vpop.permute.xlu0 %467
        %469 = vrot.lane.b32.xlu0 %v377, 127
        %v470 = vpop.permute.xlu0 %469
        %vm471 = vcmp.lt.s32.totalorder %v383, 127
        %v472 = vsel %vm471, %v468, %v470
        %v473 = vsel %vm471, %v470, %v468
        %s474 = scalar_lea.vmem %s5, 10
        %v475 = vld [vmem:[%s474] sm:$0x3]
        %v477 = vlaneseq
        %v478 = vshrl.u32 %v477, 7
        %v479 = vsub.s32 0, %v478
        %v480 = vrot.slane %v475, %v479
        %v481 = vlaneseq
        %v482 = vshrl.u32 %v481, 7
        %v483 = vsub.s32 1, %v482
        %v484 = vrot.slane %v475, %v483
        %v487 = vmul.f32 %v472, %v480
        %v488 = vmul.f32 %v473, %v484
        %489 = vrot.lane.b32.xlu0 %v376, 113
        %v490 = vpop.permute.xlu0 %489
        %491 = vrot.lane.b32.xlu0 %v377, 113
        %v492 = vpop.permute.xlu0 %491
        %vm493 = vcmp.lt.s32.totalorder %v383, 113
        %v494 = vsel %vm493, %v490, %v492
        %v495 = vsel %vm493, %v492, %v490
        %s496 = scalar_lea.vmem %s5, 12
        %v497 = vld [vmem:[%s496] sm:$0x3]
        %v499 = vlaneseq
        %v500 = vshrl.u32 %v499, 7
        %v501 = vsub.s32 0, %v500
        %v502 = vrot.slane %v497, %v501
        %v503 = vlaneseq
        %v504 = vshrl.u32 %v503, 7
        %v505 = vsub.s32 1, %v504
        %v506 = vrot.slane %v497, %v505
        %v509 = vmul.f32 %v494, %v502
        %v510 = vmul.f32 %v495, %v506
        %511 = vrot.lane.b32.xlu0 %v376, 112
        %v512 = vpop.permute.xlu0 %511
        %513 = vrot.lane.b32.xlu0 %v377, 112
        %v514 = vpop.permute.xlu0 %513
        %vm515 = vcmp.lt.s32.totalorder %v383, 112
        %v516 = vsel %vm515, %v512, %v514
        %v517 = vsel %vm515, %v514, %v512
        %s518 = scalar_lea.vmem %s5, 14
        %v519 = vld [vmem:[%s518] sm:$0x3]
        %v521 = vlaneseq
        %v522 = vshrl.u32 %v521, 7
        %v523 = vsub.s32 0, %v522
        %v524 = vrot.slane %v519, %v523
        %v525 = vlaneseq
        %v526 = vshrl.u32 %v525, 7
        %v527 = vsub.s32 1, %v526
        %v528 = vrot.slane %v519, %v527
        %v531 = vmul.f32 %v516, %v524
        %v532 = vmul.f32 %v517, %v528
        %533 = vrot.lane.b32.xlu0 %v376, 111
        %v534 = vpop.permute.xlu0 %533
        %535 = vrot.lane.b32.xlu0 %v377, 111
        %v536 = vpop.permute.xlu0 %535
        %vm537 = vcmp.lt.s32.totalorder %v383, 111
        %v538 = vsel %vm537, %v534, %v536
        %v539 = vsel %vm537, %v536, %v534
        %s540 = scalar_lea.vmem %s5, 16
        %v541 = vld [vmem:[%s540] sm:$0x3]
        %v543 = vlaneseq
        %v544 = vshrl.u32 %v543, 7
        %v545 = vsub.s32 0, %v544
        %v546 = vrot.slane %v541, %v545
        %v547 = vlaneseq
        %v548 = vshrl.u32 %v547, 7
        %v549 = vsub.s32 1, %v548
        %v550 = vrot.slane %v541, %v549
        %v553 = vmul.f32 %v538, %v546
        %v554 = vmul.f32 %v539, %v550
        %v555 = vpack.c.bf16 %v421, %v399
        %v556 = vpack.c.bf16 %v422, %v400
        %v557 = vpack.c.bf16 %v465, %v443
        %v558 = vpack.c.bf16 %v466, %v444
        %v559 = vpack.c.bf16 %v487, %v376
        %v560 = vpack.c.bf16 %v488, %v377
        %v561 = vpack.c.bf16 %v531, %v509
        %v562 = vpack.c.bf16 %v532, %v510
        %v563 = vpack.c.bf16 %v553, %v553
        %v564 = vpack.c.bf16 %v554, %v554
        %v565 = vld [vmem:[%s2] sm:$0xf]
        %v566 = vld [vmem:[%s4 + $0x28] sm:$0xff]
        %568 = vset.pattern.permute.xlu0 0
        %569 = vperm.xlu0 %568, %v566
        %v570 = vpop.permute.xlu0 %569
        %vm572 = vcmask 588800
        %v574 = vsel %vm572, %v565, 0
        %vm576 = vcmask 1043456
        %v578 = vsel %vm576, %v563, 0
        %v581 = vsel %vm576, %v564, 0
        %583 = vmatprep.subr.bf16.mxu0 0
        %584 = vmatpush1.bf16.msra.mxu0 0
        %585 = vmatprep.subr.bf16.mxu0 0
        %586 = vmatpush1.bf16.msra.mxu0 0
        %587 = vmatprep.subr.bf16.mxu0 0
        %588 = vmatpush1.bf16.msra.mxu0 0
        %589 = vmatprep.subr.bf16.mxu0 %v581
        %590 = vmatpush1.bf16.msra.mxu0 %v578
        %591 = vmatprep.subr.bf16.mxu0 %v562
        %592 = vmatpush1.bf16.msra.mxu0 %v561
        %593 = vmatprep.subr.bf16.mxu0 %v560
        %594 = vmatpush1.bf16.msra.mxu0 %v559
        %595 = vmatprep.subr.bf16.mxu0 %v558
        %596 = vmatpush1.bf16.msra.mxu0 %v557
        %597 = vmatprep.subr.bf16.mxu0 %v556
        %598 = vmatpush1.bf16.msra.mxu0 %v555
        %599 = vmatprep.subr.bf16.mxu0 0
        %600 = vmatpush2.bf16.msra.mxu0 0
        %601 = vmatprep.subr.bf16.mxu0 0
        %602 = vmatpush2.bf16.msra.mxu0 0
        %603 = vmatprep.subr.bf16.mxu0 0
        %604 = vmatpush2.bf16.msra.mxu0 0
        %605 = vmatprep.subr.bf16.mxu0 0
        %606 = vmatpush2.bf16.msra.mxu0 0
        %607 = vmatprep.subr.bf16.mxu0 0
        %608 = vmatpush2.bf16.msra.mxu0 0
        %609 = vmatprep.subr.bf16.mxu0 0
        %610 = vmatpush2.bf16.msra.mxu0 0
        %611 = vmatprep.subr.bf16.mxu0 0
        %612 = vmatpush2.bf16.msra.mxu0 0
        %613 = vmatprep.subr.bf16.mxu0 0
        %614 = vmatpush2.bf16.msra.mxu0 0
        %615 = vmatprep.mubr.bf16.mxu0 0
        %616 = vmatmul.mubr.bf16.gmra.mxu0 %v574
        %v617 = vpop.f32.mrf.mxu0
        %v618 = vadd.f32 %v570, %v617
        %v619 = vpop.f32.mrf.mxu0
        %v620 = vadd.f32 %v570, %v619
        %v621 = vpop.f32.mrf.mxu0
        %v622 = vpop.f32.mrf.mxu0
        %623 = vdwg.mxu0
        %v624 = vmax.f32 %v618, 0.0
        %v625 = vmax.f32 %v620, 0.0
        %v626 = vld [vmem:[%s3] sm:$0xf]
        %v627 = vld [vmem:[%s3 + $0x4] sm:$0xf]
        %v628 = vld [vmem:[%s3 + $0x8] sm:$0xf]
        %v629 = vld [vmem:[%s3 + $0xc] sm:$0xf]
        %v630 = vpack.c.bf16 %v624, %v624
        %v631 = vpack.c.bf16 %v625, %v625
        %v632 = vld [vmem:[%s4 + $0x30] sm:$0xff]
        %v633 = vld [vmem:[%s4 + $0x38] sm:$0xff]
        %v634 = vld [vmem:[%s4 + $0x40] sm:$0xff]
        %v635 = vld [vmem:[%s4 + $0x48] sm:$0xff]
        %637 = vset.pattern.permute.xlu0 0
        %638 = vperm.xlu0 %637, %v632
        %v639 = vpop.permute.xlu0 %638
        %642 = vset.pattern.permute.xlu0 0
        %643 = vperm.xlu0 %642, %v633
        %v644 = vpop.permute.xlu0 %643
        %647 = vset.pattern.permute.xlu0 0
        %648 = vperm.xlu0 %647, %v634
        %v649 = vpop.permute.xlu0 %648
        %652 = vset.pattern.permute.xlu0 0
        %653 = vperm.xlu0 %652, %v635
        %v654 = vpop.permute.xlu0 %653
        %v660 = vunpack.c.l.b16 %v626
        %v661 = vunpack.c.l.b16 %v627
        %v662 = vunpack.c.l.b16 %v628
        %v663 = vunpack.c.l.b16 %v629
        %v664 = vpack.c.b16 %v661, %v660
        %v665 = vpack.c.b16 %v663, %v662
        %vm666 = vcmask 64512
        %v668 = vsel %vm666, %v664, 0
        %v671 = vsel %vm666, %v665, 0
        %v674 = vsel %vm576, %v630, 0
        %v677 = vsel %vm576, %v631, 0
        %679 = vmatprep.subr.bf16.mxu0 0
        %680 = vmatpush1.bf16.msra.mxu0 0
        %681 = vmatprep.subr.bf16.mxu0 0
        %682 = vmatpush1.bf16.msra.mxu0 0
        %683 = vmatprep.subr.bf16.mxu0 0
        %684 = vmatpush1.bf16.msra.mxu0 0
        %685 = vmatprep.subr.bf16.mxu0 0
        %686 = vmatpush1.bf16.msra.mxu0 0
        %687 = vmatprep.subr.bf16.mxu0 0
        %688 = vmatpush1.bf16.msra.mxu0 0
        %689 = vmatprep.subr.bf16.mxu0 0
        %690 = vmatpush1.bf16.msra.mxu0 0
        %691 = vmatprep.subr.bf16.mxu0 0
        %692 = vmatpush1.bf16.msra.mxu0 0
        %693 = vmatprep.subr.bf16.mxu0 %v677
        %694 = vmatpush1.bf16.msra.mxu0 %v674
        %695 = vmatprep.subr.bf16.mxu0 0
        %696 = vmatpush2.bf16.msra.mxu0 0
        %697 = vmatprep.subr.bf16.mxu0 0
        %698 = vmatpush2.bf16.msra.mxu0 0
        %699 = vmatprep.subr.bf16.mxu0 0
        %700 = vmatpush2.bf16.msra.mxu0 0
        %701 = vmatprep.subr.bf16.mxu0 0
        %702 = vmatpush2.bf16.msra.mxu0 0
        %703 = vmatprep.subr.bf16.mxu0 0
        %704 = vmatpush2.bf16.msra.mxu0 0
        %705 = vmatprep.subr.bf16.mxu0 0
        %706 = vmatpush2.bf16.msra.mxu0 0
        %707 = vmatprep.subr.bf16.mxu0 0
        %708 = vmatpush2.bf16.msra.mxu0 0
        %709 = vmatprep.subr.bf16.mxu0 0
        %710 = vmatpush2.bf16.msra.mxu0 0
        %711 = vmatprep.mubr.bf16.mxu0 0
        %712 = vmatmul.mubr.bf16.gmra.mxu0 %v668
        %v713 = vpop.f32.mrf.mxu0
        %v714 = vadd.f32 %v639, %v713
        %v715 = vpop.f32.mrf.mxu0
        %v716 = vadd.f32 %v639, %v715
        %v717 = vpop.f32.mrf.mxu0
        %v718 = vadd.f32 %v644, %v717
        %v719 = vpop.f32.mrf.mxu0
        %v720 = vadd.f32 %v644, %v719
        %721 = vmatprep.mubr.bf16.mxu0 0
        %722 = vmatmul.mubr.bf16.gmra.mxu0 %v671
        %v723 = vpop.f32.mrf.mxu0
        %v724 = vadd.f32 %v649, %v723
        %v725 = vpop.f32.mrf.mxu0
        %v726 = vadd.f32 %v649, %v725
        %v727 = vpop.f32.mrf.mxu0
        %v728 = vadd.f32 %v654, %v727
        %v729 = vpop.f32.mrf.mxu0
        %v730 = vadd.f32 %v654, %v729
        %731 = vdwg.mxu0
        %v732 = vadd.f32 %v714, %v354
        %v733 = vadd.f32 %v716, %v356
        %v734 = vadd.f32 %v718, %v360
        %v735 = vadd.f32 %v720, %v362
        %v736 = vadd.f32 %v724, %v364
        %v737 = vadd.f32 %v726, %v366
        %v738 = vadd.f32 %v728, %v370
        %v739 = vadd.f32 %v730, %v372
        %v740 = vmax.f32 %v732, 0.0
        %v741 = vmax.f32 %v733, 0.0
        %v742 = vmax.f32 %v734, 0.0
        %v743 = vmax.f32 %v735, 0.0
        %v744 = vmax.f32 %v736, 0.0
        %v745 = vmax.f32 %v737, 0.0
        %v746 = vmax.f32 %v738, 0.0
        %v747 = vmax.f32 %v739, 0.0
        %748 = vst [vmem:[%s244] sm:$0xff] %v740
        %749 = vst [vmem:[%s244 + $0x8] sm:$0xff] %v741
        %750 = vst [vmem:[%s244 + $0x10] sm:$0xff] %v742
        %751 = vst [vmem:[%s244 + $0x18] sm:$0xff] %v743
        %752 = vst [vmem:[%s244 + $0x20] sm:$0xff] %v744
        %753 = vst [vmem:[%s244 + $0x28] sm:$0xff] %v745
        %754 = vst [vmem:[%s244 + $0x30] sm:$0xff] %v746
        %755 = vst [vmem:[%s244 + $0x38] sm:$0xff] %v747
        %s756 = sand.u32 %s159, 1
        %s757 = scalar_lea.sflag [#allocation3], %s756
        %s758 = sand.u32 %s159, 1
        %s759 = smul.addr %s758, 64
        %s760 = scalar_lea.vmem [#allocation2], %s759
        // Predicated region
        $region45: #{tpu_custom_call.1} parent=43 // pred_check
          %p761 = pneg %p169
        $region46: #{tpu_custom_call.1} parent=43 // pred_check_branch
          %763 = sbr.rel (%p761) target = $region48
        $region47: #{tpu_custom_call.1} parent=43 // pred_region
          %s765 = ssub.s32 1024, 1024
          %766 = vsyncadd %s757, %s765
          %s767 = smul.addr %s20, 8
          %s768 = smul.addr %s767, 128
          %s769 = scalar_lea.hbm %s6, %s768
          %s770 = sshll.u32 %s760, 4
          %s771 = int_to_ptr.vmem [resolvable:$true] %s770
          %776 = dma.vmem_to_hbm [thread:$0]  %s771, 1024, %s769, %s757, 256, 256, 16
        $region48: #{tpu_custom_call.1} parent=43 // pred_fallthru
          _
      $region44: #{tpu_custom_call.1} parent=5 // pred_fallthru
        _
      %p777 = scmp.le.s32.totalorder 2, %s15
      // Predicated region
      $region49: #{tpu_custom_call.1} parent=5 // pred_check
        %p778 = pneg %p777
      $region50: #{tpu_custom_call.1} parent=5 // pred_check_branch
        %780 = sbr.rel (%p778) target = $region52
      $region51: #{tpu_custom_call.1} parent=5 // pred_region
        %s781 = ssub.s32 %s15, 2
        // Predicated region
        $region53: #{tpu_custom_call.1} parent=51 // pred_check
          %p782 = pneg %p175
        $region54: #{tpu_custom_call.1} parent=51 // pred_check_branch
          %784 = sbr.rel (%p782) target = $region56
        $region55: #{tpu_custom_call.1} parent=51 // pred_region
          %s785 = sand.u32 %s160, 1
          %s786 = scalar_lea.sflag [#allocation3], %s785
          %s787 = sand.u32 %s160, 1
          %s788 = smul.addr %s787, 64
          %s789 = scalar_lea.vmem [#allocation2], %s788
          %790 = dma.done %s786, 1024
        $region56: #{tpu_custom_call.1} parent=51 // pred_fallthru
          _
      $region52: #{tpu_custom_call.1} parent=5 // pred_fallthru
        _
    $region6: #{tpu_custom_call.1} parent=1 // loop_footer
      %s19 = sadd.s32 1, %s15
    $region7: #{tpu_custom_call.1} parent=1 // loop_footer_branch
      %14 = sbr.rel target = $region3
    $region8: #{tpu_custom_call.1} parent=1 // loop_exit
      _
    %791 = vsyncpa [#allocation3], 1
    %s792 = scalar_lea.sflag [#allocation3], 1
    %793 = vsyncpa %s792, 1

</llo_original>
